<compile_context>
chip_gen: v5e
topology: v5e:2x2
jax: 0.10.0
libtpu: 0.0.40
codegen_flags: <defaults>
</compile_context>

<pallas_src>
import functools
import math

import jax
import jax.numpy as jnp
from jax.experimental import pallas as pl
from jax.experimental.pallas import tpu as pltpu

F32 = jnp.float32
BF16 = jnp.bfloat16
EPS = 1e-5


def _row_tile(m, cap=1024):
    """Largest row tile <= cap that divides m (m itself if it already fits)."""
    if m <= cap:
        return m
    for t in range(cap, 0, -1):
        if m % t == 0:
            return t
    return m


# ------------------------------ Pallas kernels ------------------------------

def _conv_gemm_kernel(a_ref, w_ref, o_ref, sum_ref, sq_ref):
    # bf16 x bf16 -> f32 accumulate on the MXU; per-channel BN stats fused.
    o = jnp.dot(a_ref[...], w_ref[...], preferred_element_type=jnp.float32)
    o_ref[...] = o.astype(o_ref.dtype)
    sum_ref[...] = jnp.sum(o, axis=0, keepdims=True)
    sq_ref[...] = jnp.sum(o * o, axis=0, keepdims=True)


def _conv_gemm_fold_kernel(a_ref, w_ref, s_ref, b_ref, o_ref, sum_ref, sq_ref, *,
                           pre_relu):
    # Fold the previous BN's per-channel scale/shift (+ReLU) into the A-tile load,
    # so the normalized activation never round-trips through HBM.
    a = a_ref[...].astype(jnp.float32) * s_ref[...] + b_ref[...]
    if pre_relu:
        a = jnp.maximum(a, 0.0)
    o = jnp.dot(a.astype(jnp.bfloat16), w_ref[...],
                preferred_element_type=jnp.float32)
    o_ref[...] = o.astype(o_ref.dtype)
    sum_ref[...] = jnp.sum(o, axis=0, keepdims=True)
    sq_ref[...] = jnp.sum(o * o, axis=0, keepdims=True)


def _affine_relu_kernel(x_ref, s_ref, b_ref, o_ref):
    y = x_ref[...].astype(jnp.float32) * s_ref[...] + b_ref[...]
    o_ref[...] = jnp.maximum(y, 0.0).astype(o_ref.dtype)


def _bn_add_relu_kernel(y_ref, s_ref, b_ref, r_ref, rs_ref, rb_ref, o_ref):
    # bn3 affine + (optional downsample-BN affine) + residual add + ReLU, one pass.
    y = y_ref[...].astype(jnp.float32) * s_ref[...] + b_ref[...]
    r = r_ref[...].astype(jnp.float32) * rs_ref[...] + rb_ref[...]
    o_ref[...] = jnp.maximum(y + r, 0.0).astype(o_ref.dtype)


def _ibn_kernel(x_ref, s_ref, b_ref, o_ref, *, half):
    # IBN-a for one sample, full channel width, lane-dense:
    #   channels [0, half)  -> InstanceNorm over H*W, then gamma/beta
    #   channels [half, C)  -> BatchNorm affine (scale/shift precomputed from the
    #                          fused GEMM stats)
    # followed by ReLU, written as a single full-C tile.
    x = x_ref[...].astype(jnp.float32)                    # (H*W, C)
    hw = x.shape[0]
    mean = jnp.sum(x, axis=0, keepdims=True) / hw
    xc = x - mean
    var = jnp.sum(xc * xc, axis=0, keepdims=True) / hw
    xn = xc * jax.lax.rsqrt(var + EPS)
    cmask = jax.lax.broadcasted_iota(jnp.int32, x.shape, 1) < half
    base = jnp.where(cmask, xn, x)
    y = base * s_ref[...] + b_ref[...]
    o_ref[...] = jnp.maximum(y, 0.0).astype(o_ref.dtype)


def _maxpool9_kernel(*refs):
    # 9 shifted views in, one lane-dense max out (all f32 math inside).
    out_ref = refs[-1]
    m = refs[0][...].astype(jnp.float32)
    for r in refs[1:9]:
        m = jnp.maximum(m, r[...].astype(jnp.float32))
    out_ref[...] = m.astype(out_ref.dtype)


# ------------------------------ kernel wrappers ------------------------------

def conv_gemm(a, w, pre_scale=None, pre_shift=None, pre_relu=False, row_cap=1024):
    """out = (optionally relu(a*scale+shift)) @ w, plus fused per-channel sum/sumsq.

    a: (M, K) bf16, w: (K, N) bf16.  Returns (out bf16 (M,N), sums f32, sqs f32).
    """
    M, K = a.shape
    K2, N = w.shape
    assert K == K2
    tm = _row_tile(M, row_cap)
    mt = M // tm
    grid = (mt,)

    a_spec = pl.BlockSpec((tm, K), lambda i: (i, 0))
    w_spec = pl.BlockSpec((K, N), lambda i: (0, 0))
    o_spec = pl.BlockSpec((tm, N), lambda i: (i, 0))
    st_spec = pl.BlockSpec((None, 1, N), lambda i: (i, 0, 0))
    out_shape = (jax.ShapeDtypeStruct((M, N), BF16),
                 jax.ShapeDtypeStruct((mt, 1, N), F32),
                 jax.ShapeDtypeStruct((mt, 1, N), F32))

    if pre_scale is None:
        kern = _conv_gemm_kernel
        in_specs = [a_spec, w_spec]
        args = (a.astype(BF16), w.astype(BF16))
    else:
        kern = functools.partial(_conv_gemm_fold_kernel, pre_relu=pre_relu)
        v_spec = pl.BlockSpec((1, K), lambda i: (0, 0))
        in_specs = [a_spec, w_spec, v_spec, v_spec]
        args = (a.astype(BF16), w.astype(BF16),
                pre_scale.reshape(1, K).astype(F32),
                pre_shift.reshape(1, K).astype(F32))

    return pl.pallas_call(
        kern,
        out_shape=out_shape,
        grid=grid,
        in_specs=in_specs,
        out_specs=(o_spec, st_spec, st_spec),
        compiler_params=pltpu.CompilerParams(dimension_semantics=("parallel",)),
    )(*args)


def bn_scale_shift(sums, sqs, count, gamma, beta):
    """Turn fused GEMM stats into a per-channel affine (train-mode BN, biased var)."""
    mean = jnp.sum(sums, axis=(0, 1)) / count
    var = jnp.maximum(jnp.sum(sqs, axis=(0, 1)) / count - mean * mean, 0.0)
    scale = gamma * jax.lax.rsqrt(var + EPS)
    shift = beta - mean * scale
    return scale, shift


def affine_relu(x2d, scale, shift, row_cap=1024):
    R, C = x2d.shape
    tr = _row_tile(R, row_cap)
    x_spec = pl.BlockSpec((tr, C), lambda i: (i, 0))
    v_spec = pl.BlockSpec((1, C), lambda i: (0, 0))
    return pl.pallas_call(
        _affine_relu_kernel,
        out_shape=jax.ShapeDtypeStruct((R, C), BF16),
        grid=(R // tr,),
        in_specs=[x_spec, v_spec, v_spec],
        out_specs=x_spec,
        compiler_params=pltpu.CompilerParams(dimension_semantics=("parallel",)),
    )(x2d, scale.reshape(1, C).astype(F32), shift.reshape(1, C).astype(F32))


def bn_add_relu(y2d, s3, b3, r2d, rs, rb, row_cap=1024):
    R, C = y2d.shape
    tr = _row_tile(R, row_cap)
    x_spec = pl.BlockSpec((tr, C), lambda i: (i, 0))
    v_spec = pl.BlockSpec((1, C), lambda i: (0, 0))
    return pl.pallas_call(
        _bn_add_relu_kernel,
        out_shape=jax.ShapeDtypeStruct((R, C), BF16),
        grid=(R // tr,),
        in_specs=[x_spec, v_spec, v_spec, x_spec, v_spec, v_spec],
        out_specs=x_spec,
        compiler_params=pltpu.CompilerParams(dimension_semantics=("parallel",)),
    )(y2d,
      s3.reshape(1, C).astype(F32), b3.reshape(1, C).astype(F32),
      r2d,
      rs.reshape(1, C).astype(F32), rb.reshape(1, C).astype(F32))


def ibn_apply(x3, scale_vec, shift_vec, half):
    """x3: (N, H*W, C) bf16.  One fused IBN-a + ReLU pass per sample."""
    N, HW, C = x3.shape
    x_spec = pl.BlockSpec((None, HW, C), lambda n: (n, 0, 0))
    v_spec = pl.BlockSpec((1, C), lambda n: (0, 0))
    return pl.pallas_call(
        functools.partial(_ibn_kernel, half=half),
        out_shape=jax.ShapeDtypeStruct((N, HW, C), BF16),
        grid=(N,),
        in_specs=[x_spec, v_spec, v_spec],
        out_specs=x_spec,
        compiler_params=pltpu.CompilerParams(dimension_semantics=("parallel",)),
    )(x3, scale_vec.reshape(1, C).astype(F32), shift_vec.reshape(1, C).astype(F32))


def max_pool_3x3_s2(x):
    """x: (N, H, W, C) bf16, values >= 0 (post-ReLU), so zero padding is exact."""
    N, H, W, C = x.shape
    xp = jnp.pad(x, ((0, 0), (1, 1), (1, 1), (0, 0)))
    Ho = (H + 2 - 3) // 2 + 1
    Wo = (W + 2 - 3) // 2 + 1
    taps = []
    for i in range(3):
        for j in range(3):
            taps.append(xp[:, i:i + 2 * (Ho - 1) + 1:2,
                           j:j + 2 * (Wo - 1) + 1:2, :].reshape(-1, C))
    R = N * Ho * Wo
    tr = _row_tile(R, 1024)
    spec = pl.BlockSpec((tr, C), lambda i: (i, 0))
    out = pl.pallas_call(
        _maxpool9_kernel,
        out_shape=jax.ShapeDtypeStruct((R, C), BF16),
        grid=(R // tr,),
        in_specs=[spec] * 9,
        out_specs=spec,
        compiler_params=pltpu.CompilerParams(dimension_semantics=("parallel",)),
    )(*taps)
    return out.reshape(N, Ho, Wo, C)


# --------------------------- layer glue (JAX-level) ---------------------------

def im2col(x, kh, kw, stride, pad):
    """Column extraction in bf16.  K index order = ((i*kw + j) * C + c), matching
    the (kh, kw, Cin, Cout) -> (kh*kw*Cin, Cout) weight reshape."""
    N, H, W, C = x.shape
    xp = jnp.pad(x, ((0, 0), (pad, pad), (pad, pad), (0, 0)))
    Ho = (H + 2 * pad - kh) // stride + 1
    Wo = (W + 2 * pad - kw) // stride + 1
    cols = []
    for i in range(kh):
        for j in range(kw):
            cols.append(xp[:, i:i + stride * (Ho - 1) + 1:stride,
                           j:j + stride * (Wo - 1) + 1:stride, :])
    cols = jnp.stack(cols, axis=3)                      # (N, Ho, Wo, kh*kw, C)
    return cols.reshape(N * Ho * Wo, kh * kw * C), (N, Ho, Wo)


def bottleneck_forward(x, p):
    """x: (N, H, W, Cin) bf16 -> (N, Ho, Wo, 4*planes) bf16."""
    N, H, W, Cin = x.shape
    planes = p['conv1_w'].shape[1]
    cout = p['conv3_w'].shape[1]
    stride = p['stride']

    # conv1 (1x1) with fused BN stats
    a1 = x.reshape(-1, Cin)
    m1 = a1.shape[0]
    y1, s1, q1 = conv_gemm(a1, p['conv1_w'])

    if p['ibn']:
        half = planes // 2
        in_g, in_b = p['in1']
        bn_g, bn_b = p['bn1']
        bs, bb = bn_scale_shift(s1[:, :, half:], q1[:, :, half:], m1, bn_g, bn_b)
        scale_vec = jnp.concatenate([in_g, bs])
        shift_vec = jnp.concatenate([in_b, bb])
        h1 = ibn_apply(y1.reshape(N, H * W, planes), scale_vec, shift_vec, half)
        h1 = h1.reshape(N, H, W, planes)
    else:
        bs, bb = bn_scale_shift(s1, q1, m1, *p['bn1'])
        h1 = affine_relu(y1, bs, bb).reshape(N, H, W, planes)

    # conv2 (3x3, stride) with fused BN stats
    cols, (N2, Ho, Wo) = im2col(h1, 3, 3, stride, 1)
    m2 = N2 * Ho * Wo
    y2, s2, q2 = conv_gemm(cols, p['conv2_w'])
    bs2, bb2 = bn_scale_shift(s2, q2, m2, *p['bn2'])

    # conv3 (1x1): bn2 + ReLU folded into the A-tile load; fused bn3 stats
    y3, s3, q3 = conv_gemm(y2, p['conv3_w'], pre_scale=bs2, pre_shift=bb2,
                           pre_relu=True)
    bs3, bb3 = bn_scale_shift(s3, q3, m2, *p['bn3'])

    # residual branch
    if 'ds_w' in p:
        xs = x[:, ::stride, ::stride, :].reshape(-1, Cin)
        yd, sd, qd = conv_gemm(xs, p['ds_w'])
        rs, rb = bn_scale_shift(sd, qd, m2, *p['ds_bn'])
        res = yd
    else:
        res = x.reshape(-1, cout)
        rs = jnp.ones((cout,), F32)
        rb = jnp.zeros((cout,), F32)

    # bn3 + (ds-BN) + residual add + ReLU in one kernel
    out = bn_add_relu(y3, bs3, bb3, res, rs, rb)
    return out.reshape(N2, Ho, Wo, cout)


def resnet_ibn_forward(x_nchw, params):
    x = jnp.transpose(x_nchw, (0, 2, 3, 1)).astype(BF16)    # NCHW -> NHWC, bf16
    # stem: conv 7x7/s2 (fused stats) -> bn1 + relu -> maxpool 3x3/s2
    cols, (N, Ho, Wo) = im2col(x, 7, 7, 2, 3)
    m = N * Ho * Wo
    y, s, q = conv_gemm(cols, params['conv1_w'])
    bs, bb = bn_scale_shift(s, q, m, *params['bn1'])
    h = affine_relu(y, bs, bb).reshape(N, Ho, Wo, -1)
    h = max_pool_3x3_s2(h)
    for name in ('layer1', 'layer2', 'layer3', 'layer4'):
        for blk in params[name]:
            h = bottleneck_forward(h, blk)
    return jnp.transpose(h.astype(F32), (0, 3, 1, 2))        # NHWC -> NCHW


# ------------------------------ parameter construction ------------------------------

def conv_init2d(key, kh, kw, cin, cout):
    # matches: m.weight.data.normal_(0, sqrt(2 / (kh*kw*out_channels)))
    std = math.sqrt(2.0 / (kh * kw * cout))
    w = (std * jax.random.normal(key, (kh, kw, cin, cout))).astype(F32)
    return w.reshape(kh * kw * cin, cout).astype(BF16)


def make_block_params(key, inplanes, planes, ibn, stride, need_ds):
    ks = jax.random.split(key, 4)
    expansion = 4
    p = {'ibn': ibn, 'stride': stride}
    p['conv1_w'] = conv_init2d(ks[0], 1, 1, inplanes, planes)
    if ibn:
        half = planes // 2
        p['in1'] = (jnp.ones((half,), F32), jnp.zeros((half,), F32))
        p['bn1'] = (jnp.ones((planes - half,), F32), jnp.zeros((planes - half,), F32))
    else:
        p['bn1'] = (jnp.ones((planes,), F32), jnp.zeros((planes,), F32))
    p['conv2_w'] = conv_init2d(ks[1], 3, 3, planes, planes)
    p['bn2'] = (jnp.ones((planes,), F32), jnp.zeros((planes,), F32))
    p['conv3_w'] = conv_init2d(ks[2], 1, 1, planes, planes * expansion)
    p['bn3'] = (jnp.ones((planes * expansion,), F32), jnp.zeros((planes * expansion,), F32))
    if need_ds:
        p['ds_w'] = conv_init2d(ks[3], 1, 1, inplanes, planes * expansion)
        p['ds_bn'] = (jnp.ones((planes * expansion,), F32),
                      jnp.zeros((planes * expansion,), F32))
    return p


def build_resnet_ibn_params(key, layers=(1, 1, 1, 1), last_stride=1):
    scale = 64
    expansion = 4
    keys = iter(jax.random.split(key, 128))
    params = {}
    params['conv1_w'] = conv_init2d(next(keys), 7, 7, 3, scale)
    params['bn1'] = (jnp.ones((scale,), F32), jnp.zeros((scale,), F32))
    inplanes = scale
    cfg = [(scale, layers[0], 1),
           (scale * 2, layers[1], 2),
           (scale * 4, layers[2], 2),
           (scale * 8, layers[3], last_stride)]
    for li, (planes, nblocks, stride) in enumerate(cfg, start=1):
        blocks = []
        ibn = (planes != 512)
        for b in range(nblocks):
            s = stride if b == 0 else 1
            need_ds = (b == 0) and (s != 1 or inplanes != planes * expansion)
            blocks.append(make_block_params(next(keys), inplanes, planes, ibn, s, need_ds))
            inplanes = planes * expansion
        params[f'layer{li}'] = blocks
    return params


# ------------------------------ main ------------------------------

if __name__ == "__main__":
    key = jax.random.PRNGKey(0)
    pkey, xkey = jax.random.split(key)

    # small config: layers=[1,1,1,1] bottleneck blocks (expansion=4), batch=2, 32x32 input
    params = build_resnet_ibn_params(pkey, layers=(1, 1, 1, 1), last_stride=1)
    x = jax.random.normal(xkey, (2, 3, 32, 32), dtype=F32)   # NCHW, like the PyTorch module

    y = resnet_ibn_forward(x, params)
    y = jax.block_until_ready(y)

    assert y.shape == (2, 2048, 2, 2), y.shape
    assert bool(jnp.all(jnp.isfinite(y)))
    print("KERNEL_OK")
</pallas_src>

<mosaic_0001>
module attributes {stable_mosaic.version = 11 : i64} {
  func.func @_conv_gemm_kernel(%arg0: i32, %arg1: memref<512x147xbf16, #tpu.memory_space<vmem>>, %arg2: memref<147x64xbf16, #tpu.memory_space<vmem>>, %arg3: memref<512x64xbf16, #tpu.memory_space<vmem>>, %arg4: memref<1x1x64xf32, #tpu.memory_space<vmem>>, %arg5: memref<1x1x64xf32, #tpu.memory_space<vmem>>) attributes {dimension_semantics = [#tpu.dimension_semantics<parallel>], iteration_bounds = array<i64: 1>, scalar_prefetch = 0 : i64, scratch_operands = 0 : i64, tpu.core_type = #tpu.core_type<tc>, window_params = [{transform_indices = @transform_0, window_bounds = array<i64: 512, 147>}, {pipeline_mode = #tpu.pipeline_mode<synchronous>, transform_indices = @transform_1, window_bounds = array<i64: 147, 64>}, {transform_indices = @transform_2, window_bounds = array<i64: 512, 64>}, {transform_indices = @transform_3, window_bounds = array<i64: 1, 1, 64>}, {transform_indices = @transform_4, window_bounds = array<i64: 1, 1, 64>}]} {
    %c0 = arith.constant 0 : index
    %c0_0 = arith.constant 0 : index
    %0 = vector.load %arg1[%c0, %c0_0] : memref<512x147xbf16, #tpu.memory_space<vmem>>, vector<512x147xbf16>
    %c0_1 = arith.constant 0 : index
    %c0_2 = arith.constant 0 : index
    %1 = vector.load %arg2[%c0_1, %c0_2] : memref<147x64xbf16, #tpu.memory_space<vmem>>, vector<147x64xbf16>
    %cst = arith.constant dense<0.000000e+00> : vector<512x64xf32>
    %2 = tpu.matmul %0, %1, %cst {dimension_numbers = #tpu.dot_dimension_numbers<[1], [0], [0], [1], [0, 0, 1, 1], [], []>} : vector<512x147xbf16>, vector<147x64xbf16>, vector<512x64xf32> -> vector<512x64xf32>
    %3 = arith.truncf %2 : vector<512x64xf32> to vector<512x64xbf16>
    %c0_3 = arith.constant 0 : index
    %c0_4 = arith.constant 0 : index
    %4 = vector.load %arg3[%c0_3, %c0_4] : memref<512x64xbf16, #tpu.memory_space<vmem>>, vector<512x64xbf16>
    tpu.vector_store %arg3[%c0_3, %c0_4], %3 {strides = array<i32>} : memref<512x64xbf16, #tpu.memory_space<vmem>>, vector<512x64xbf16>,
    %cst_5 = arith.constant dense<0.000000e+00> : vector<64xf32>
    %5 = vector.multi_reduction <add>, %2, %cst_5 [0] : vector<512x64xf32> to vector<64xf32>
    %6 = vector.shape_cast %5 : vector<64xf32> to vector<1x64xf32>
    %c0_6 = arith.constant 0 : index
    %c0_7 = arith.constant 0 : index
    %c0_8 = arith.constant 0 : index
    %7 = vector.load %arg4[%c0_6, %c0_7, %c0_8] : memref<1x1x64xf32, #tpu.memory_space<vmem>>, vector<1x1x64xf32>
    %8 = vector.shape_cast %7 : vector<1x1x64xf32> to vector<1x64xf32>
    %9 = vector.shape_cast %6 : vector<1x64xf32> to vector<1x1x64xf32>
    tpu.vector_store %arg4[%c0_6, %c0_7, %c0_8], %9 {strides = array<i32>} : memref<1x1x64xf32, #tpu.memory_space<vmem>>, vector<1x1x64xf32>,
    %10 = arith.mulf %2, %2 : vector<512x64xf32>
    %cst_9 = arith.constant dense<0.000000e+00> : vector<64xf32>
    %11 = vector.multi_reduction <add>, %10, %cst_9 [0] : vector<512x64xf32> to vector<64xf32>
    %12 = vector.shape_cast %11 : vector<64xf32> to vector<1x64xf32>
    %c0_10 = arith.constant 0 : index
    %c0_11 = arith.constant 0 : index
    %c0_12 = arith.constant 0 : index
    %13 = vector.load %arg5[%c0_10, %c0_11, %c0_12] : memref<1x1x64xf32, #tpu.memory_space<vmem>>, vector<1x1x64xf32>
    %14 = vector.shape_cast %13 : vector<1x1x64xf32> to vector<1x64xf32>
    %15 = vector.shape_cast %12 : vector<1x64xf32> to vector<1x1x64xf32>
    tpu.vector_store %arg5[%c0_10, %c0_11, %c0_12], %15 {strides = array<i32>} : memref<1x1x64xf32, #tpu.memory_space<vmem>>, vector<1x1x64xf32>,
    return
  }
  func.func @transform_0(%arg0: i32) -> (i32, i32) {
    %c0_i32 = arith.constant 0 : i32
    %c0_i32_0 = arith.constant 0 : i32
    return %arg0, %c0_i32 : i32, i32
  }
  func.func @transform_1(%arg0: i32) -> (i32, i32) {
    %c0_i32 = arith.constant 0 : i32
    %c0_i32_0 = arith.constant 0 : i32
    %c0_i32_1 = arith.constant 0 : i32
    return %c0_i32, %c0_i32_0 : i32, i32
  }
  func.func @transform_2(%arg0: i32) -> (i32, i32) {
    %c0_i32 = arith.constant 0 : i32
    %c0_i32_0 = arith.constant 0 : i32
    return %arg0, %c0_i32 : i32, i32
  }
  func.func @transform_3(%arg0: i32) -> (i32, i32, i32) {
    %c0_i32 = arith.constant 0 : i32
    %c0_i32_0 = arith.constant 0 : i32
    %c0_i32_1 = arith.constant 0 : i32
    return %arg0, %c0_i32, %c0_i32_0 : i32, i32, i32
  }
  func.func @transform_4(%arg0: i32) -> (i32, i32, i32) {
    %c0_i32 = arith.constant 0 : i32
    %c0_i32_0 = arith.constant 0 : i32
    %c0_i32_1 = arith.constant 0 : i32
    return %arg0, %c0_i32, %c0_i32_0 : i32, i32, i32
  }
}

</mosaic_0001>

<llo_original>
// kernel: tpu_custom_call.1
$region0: #{tpu_custom_call.1}
  #allocation0 [shape = 'u32[]', space=smem, size = 0x4, offset = 0x4, fixed_abs, tag = 'smem constant byte address 0x4 - core index']
  #allocation1 [shape = 'u32[72,128]{1,0:T(1,128)}', space=vmem, size = 0x9000, scoped, tag = 'internal scratch']
  %s0 = inlined_call_operand.vmem [shape: bf16[512,147], index: 0, kind: input, shape index: {}]
  %s1 = inlined_call_operand.vmem [shape: bf16[147,64], index: 1, kind: input, shape index: {}]
  %s2 = inlined_call_operand.vmem [shape: bf16[512,64], index: 2, kind: output, shape index: {0}]
  %s3 = inlined_call_operand.hbm [shape: f32[1,1,64], index: 3, kind: output, shape index: {1}]
  %s4 = inlined_call_operand.hbm [shape: f32[1,1,64], index: 4, kind: output, shape index: {2}]
  %5 = xla_tuple %s2, %s3, %s4
  %s6 = sld [smem:[#allocation0]]
  $region34: #{tpu_custom_call.1} parent=0
    _
  %s8 = ssub.s32 1, %s6
  %s9 = scalar_select 0, %s8, %s6
  $region1: #{tpu_custom_call.1} parent=0
    #allocation2 [shape = 'u8[512]{0}', space=vmem, size = 0x400, scoped, tag = 'output window, operand 1, single buffered']
    #allocation3 [shape = 's32[1]{0}', space=sflag, size = 0x4, scoped, tag = 'scoped memory for tpu_custom_call.1']
    #allocation4 [shape = 'u8[512]{0}', space=vmem, size = 0x400, scoped, tag = 'output window, operand 2, single buffered']
    #allocation5 [shape = 's32[1]{0}', space=sflag, size = 0x4, scoped, tag = 'scoped memory for tpu_custom_call.1']
    %10 = vsyncpa [#allocation3], 0
    %11 = vsyncpa [#allocation5], 0
    // Predicated region
    $region2: #{tpu_custom_call.1} parent=1 // pred_check
      _
    $region3: #{tpu_custom_call.1} parent=1 // pred_check_branch
      %13 = sbr.rel (0) target = $region5
    $region4: #{tpu_custom_call.1} parent=1 // pred_region
      _
    $region5: #{tpu_custom_call.1} parent=1 // pred_fallthru
      _
    // Predicated region
    $region6: #{tpu_custom_call.1} parent=1 // pred_check
      _
    $region7: #{tpu_custom_call.1} parent=1 // pred_check_branch
      %15 = sbr.rel (0) target = $region9
    $region8: #{tpu_custom_call.1} parent=1 // pred_region
      _
    $region9: #{tpu_custom_call.1} parent=1 // pred_fallthru
      _
    %v17 = vld [vmem:[%s0] sm:$0xff]
    %v18 = vld [vmem:[%s0 + $0x8] sm:$0xff]
    %v19 = vld [vmem:[%s0 + $0x10] sm:$0xff]
    %v20 = vld [vmem:[%s0 + $0x18] sm:$0xff]
    %v21 = vld [vmem:[%s0 + $0x20] sm:$0xff]
    %v22 = vld [vmem:[%s0 + $0x28] sm:$0xff]
    %v23 = vld [vmem:[%s0 + $0x30] sm:$0xff]
    %v24 = vld [vmem:[%s0 + $0x38] sm:$0xff]
    %v25 = vld [vmem:[%s0 + $0x40] sm:$0xff]
    %v26 = vld [vmem:[%s0 + $0x48] sm:$0xff]
    %v27 = vld [vmem:[%s0 + $0x50] sm:$0xff]
    %v28 = vld [vmem:[%s0 + $0x58] sm:$0xff]
    %v29 = vld [vmem:[%s0 + $0x60] sm:$0xff]
    %v30 = vld [vmem:[%s0 + $0x68] sm:$0xff]
    %v31 = vld [vmem:[%s0 + $0x70] sm:$0xff]
    %v32 = vld [vmem:[%s0 + $0x78] sm:$0xff]
    %v33 = vld [vmem:[%s0 + $0x80] sm:$0xff]
    %v34 = vld [vmem:[%s0 + $0x88] sm:$0xff]
    %v35 = vld [vmem:[%s0 + $0x90] sm:$0xff]
    %v36 = vld [vmem:[%s0 + $0x98] sm:$0xff]
    %v37 = vld [vmem:[%s0 + $0xa0] sm:$0xff]
    %v38 = vld [vmem:[%s0 + $0xa8] sm:$0xff]
    %v39 = vld [vmem:[%s0 + $0xb0] sm:$0xff]
    %v40 = vld [vmem:[%s0 + $0xb8] sm:$0xff]
    %v41 = vld [vmem:[%s0 + $0xc0] sm:$0xff]
    %v42 = vld [vmem:[%s0 + $0xc8] sm:$0xff]
    %v43 = vld [vmem:[%s0 + $0xd0] sm:$0xff]
    %v44 = vld [vmem:[%s0 + $0xd8] sm:$0xff]
    %v45 = vld [vmem:[%s0 + $0xe0] sm:$0xff]
    %v46 = vld [vmem:[%s0 + $0xe8] sm:$0xff]
    %v47 = vld [vmem:[%s0 + $0xf0] sm:$0xff]
    %v48 = vld [vmem:[%s0 + $0xf8] sm:$0xff]
    %v49 = vld [vmem:[%s0 + $0x100] sm:$0xff]
    %v50 = vld [vmem:[%s0 + $0x108] sm:$0xff]
    %v51 = vld [vmem:[%s0 + $0x110] sm:$0xff]
    %v52 = vld [vmem:[%s0 + $0x118] sm:$0xff]
    %v53 = vld [vmem:[%s0 + $0x120] sm:$0xff]
    %v54 = vld [vmem:[%s0 + $0x128] sm:$0xff]
    %v55 = vld [vmem:[%s0 + $0x130] sm:$0xff]
    %v56 = vld [vmem:[%s0 + $0x138] sm:$0xff]
    %v57 = vld [vmem:[%s0 + $0x140] sm:$0xff]
    %v58 = vld [vmem:[%s0 + $0x148] sm:$0xff]
    %v59 = vld [vmem:[%s0 + $0x150] sm:$0xff]
    %v60 = vld [vmem:[%s0 + $0x158] sm:$0xff]
    %v61 = vld [vmem:[%s0 + $0x160] sm:$0xff]
    %v62 = vld [vmem:[%s0 + $0x168] sm:$0xff]
    %v63 = vld [vmem:[%s0 + $0x170] sm:$0xff]
    %v64 = vld [vmem:[%s0 + $0x178] sm:$0xff]
    %v65 = vld [vmem:[%s0 + $0x180] sm:$0xff]
    %v66 = vld [vmem:[%s0 + $0x188] sm:$0xff]
    %v67 = vld [vmem:[%s0 + $0x190] sm:$0xff]
    %v68 = vld [vmem:[%s0 + $0x198] sm:$0xff]
    %v69 = vld [vmem:[%s0 + $0x1a0] sm:$0xff]
    %v70 = vld [vmem:[%s0 + $0x1a8] sm:$0xff]
    %v71 = vld [vmem:[%s0 + $0x1b0] sm:$0xff]
    %v72 = vld [vmem:[%s0 + $0x1b8] sm:$0xff]
    %v73 = vld [vmem:[%s0 + $0x1c0] sm:$0xff]
    %v74 = vld [vmem:[%s0 + $0x1c8] sm:$0xff]
    %v75 = vld [vmem:[%s0 + $0x1d0] sm:$0xff]
    %v76 = vld [vmem:[%s0 + $0x1d8] sm:$0xff]
    %v77 = vld [vmem:[%s0 + $0x1e0] sm:$0xff]
    %v78 = vld [vmem:[%s0 + $0x1e8] sm:$0xff]
    %v79 = vld [vmem:[%s0 + $0x1f0] sm:$0xff]
    %v80 = vld [vmem:[%s0 + $0x1f8] sm:$0xff]
    %v81 = vld [vmem:[%s1] sm:$0xf]
    %v82 = vld [vmem:[%s1 + $0x4] sm:$0xf]
    %v83 = vld [vmem:[%s1 + $0x8] sm:$0xf]
    %v84 = vld [vmem:[%s1 + $0xc] sm:$0xf]
    %v85 = vld [vmem:[%s1 + $0x10] sm:$0xf]
    %v86 = vld [vmem:[%s1 + $0x14] sm:$0xf]
    %v87 = vld [vmem:[%s1 + $0x18] sm:$0xf]
    %v88 = vld [vmem:[%s1 + $0x1c] sm:$0xf]
    %v89 = vld [vmem:[%s1 + $0x20] sm:$0xf]
    %v90 = vld [vmem:[%s1 + $0x24] sm:$0xf]
    %v91 = vld [vmem:[%s1 + $0x28] sm:$0xf]
    %v92 = vld [vmem:[%s1 + $0x2c] sm:$0xf]
    %v93 = vld [vmem:[%s1 + $0x30] sm:$0xf]
    %v94 = vld [vmem:[%s1 + $0x34] sm:$0xf]
    %v95 = vld [vmem:[%s1 + $0x38] sm:$0xf]
    %v96 = vld [vmem:[%s1 + $0x3c] sm:$0xf]
    %v97 = vld [vmem:[%s1 + $0x40] sm:$0xf]
    %v98 = vld [vmem:[%s1 + $0x44] sm:$0xf]
    %v99 = vld [vmem:[%s1 + $0x48] sm:$0x3]
    %v164 = vunpack.c.l.b16 %v17
    %v165 = vunpack.c.h.b16 %v17
    %v166 = vunpack.c.l.b16 %v18
    %v167 = vunpack.c.h.b16 %v18
    %v168 = vunpack.c.l.b16 %v19
    %v169 = vunpack.c.h.b16 %v19
    %v170 = vunpack.c.l.b16 %v20
    %v171 = vunpack.c.h.b16 %v20
    %v172 = vunpack.c.l.b16 %v21
    %v173 = vunpack.c.h.b16 %v21
    %v174 = vunpack.c.l.b16 %v22
    %v175 = vunpack.c.h.b16 %v22
    %v176 = vunpack.c.l.b16 %v23
    %v177 = vunpack.c.h.b16 %v23
    %v178 = vunpack.c.l.b16 %v24
    %v179 = vunpack.c.h.b16 %v24
    %v180 = vunpack.c.l.b16 %v25
    %v181 = vunpack.c.h.b16 %v25
    %v182 = vunpack.c.l.b16 %v26
    %v183 = vunpack.c.h.b16 %v26
    %v184 = vunpack.c.l.b16 %v27
    %v185 = vunpack.c.h.b16 %v27
    %v186 = vunpack.c.l.b16 %v28
    %v187 = vunpack.c.h.b16 %v28
    %v188 = vunpack.c.l.b16 %v29
    %v189 = vunpack.c.h.b16 %v29
    %v190 = vunpack.c.l.b16 %v30
    %v191 = vunpack.c.h.b16 %v30
    %v192 = vunpack.c.l.b16 %v31
    %v193 = vunpack.c.h.b16 %v31
    %v194 = vunpack.c.l.b16 %v32
    %v195 = vunpack.c.h.b16 %v32
    %v196 = vunpack.c.l.b16 %v33
    %v197 = vunpack.c.h.b16 %v33
    %v198 = vunpack.c.l.b16 %v34
    %v199 = vunpack.c.h.b16 %v34
    %v200 = vunpack.c.l.b16 %v35
    %v201 = vunpack.c.h.b16 %v35
    %v202 = vunpack.c.l.b16 %v36
    %v203 = vunpack.c.h.b16 %v36
    %v204 = vunpack.c.l.b16 %v37
    %v205 = vunpack.c.h.b16 %v37
    %v206 = vunpack.c.l.b16 %v38
    %v207 = vunpack.c.h.b16 %v38
    %v208 = vunpack.c.l.b16 %v39
    %v209 = vunpack.c.h.b16 %v39
    %v210 = vunpack.c.l.b16 %v40
    %v211 = vunpack.c.h.b16 %v40
    %v212 = vunpack.c.l.b16 %v41
    %v213 = vunpack.c.h.b16 %v41
    %v214 = vunpack.c.l.b16 %v42
    %v215 = vunpack.c.h.b16 %v42
    %v216 = vunpack.c.l.b16 %v43
    %v217 = vunpack.c.h.b16 %v43
    %v218 = vunpack.c.l.b16 %v44
    %v219 = vunpack.c.h.b16 %v44
    %v220 = vunpack.c.l.b16 %v45
    %v221 = vunpack.c.h.b16 %v45
    %v222 = vunpack.c.l.b16 %v46
    %v223 = vunpack.c.h.b16 %v46
    %v224 = vunpack.c.l.b16 %v47
    %v225 = vunpack.c.h.b16 %v47
    %v226 = vunpack.c.l.b16 %v48
    %v227 = vunpack.c.h.b16 %v48
    %v228 = vunpack.c.l.b16 %v49
    %v229 = vunpack.c.h.b16 %v49
    %v230 = vunpack.c.l.b16 %v50
    %v231 = vunpack.c.h.b16 %v50
    %v232 = vunpack.c.l.b16 %v51
    %v233 = vunpack.c.h.b16 %v51
    %v234 = vunpack.c.l.b16 %v52
    %v235 = vunpack.c.h.b16 %v52
    %v236 = vunpack.c.l.b16 %v53
    %v237 = vunpack.c.h.b16 %v53
    %v238 = vunpack.c.l.b16 %v54
    %v239 = vunpack.c.h.b16 %v54
    %v240 = vunpack.c.l.b16 %v55
    %v241 = vunpack.c.h.b16 %v55
    %v242 = vunpack.c.l.b16 %v56
    %v243 = vunpack.c.h.b16 %v56
    %v244 = vunpack.c.l.b16 %v57
    %v245 = vunpack.c.h.b16 %v57
    %v246 = vunpack.c.l.b16 %v58
    %v247 = vunpack.c.h.b16 %v58
    %v248 = vunpack.c.l.b16 %v59
    %v249 = vunpack.c.h.b16 %v59
    %v250 = vunpack.c.l.b16 %v60
    %v251 = vunpack.c.h.b16 %v60
    %v252 = vunpack.c.l.b16 %v61
    %v253 = vunpack.c.h.b16 %v61
    %v254 = vunpack.c.l.b16 %v62
    %v255 = vunpack.c.h.b16 %v62
    %v256 = vunpack.c.l.b16 %v63
    %v257 = vunpack.c.h.b16 %v63
    %v258 = vunpack.c.l.b16 %v64
    %v259 = vunpack.c.h.b16 %v64
    %v260 = vunpack.c.l.b16 %v65
    %v261 = vunpack.c.h.b16 %v65
    %v262 = vunpack.c.l.b16 %v66
    %v263 = vunpack.c.h.b16 %v66
    %v264 = vunpack.c.l.b16 %v67
    %v265 = vunpack.c.h.b16 %v67
    %v266 = vunpack.c.l.b16 %v68
    %v267 = vunpack.c.h.b16 %v68
    %v268 = vunpack.c.l.b16 %v69
    %v269 = vunpack.c.h.b16 %v69
    %v270 = vunpack.c.l.b16 %v70
    %v271 = vunpack.c.h.b16 %v70
    %v272 = vunpack.c.l.b16 %v71
    %v273 = vunpack.c.h.b16 %v71
    %v274 = vunpack.c.l.b16 %v72
    %v275 = vunpack.c.h.b16 %v72
    %v276 = vunpack.c.l.b16 %v73
    %v277 = vunpack.c.h.b16 %v73
    %v278 = vunpack.c.l.b16 %v74
    %v279 = vunpack.c.h.b16 %v74
    %v280 = vunpack.c.l.b16 %v75
    %v281 = vunpack.c.h.b16 %v75
    %v282 = vunpack.c.l.b16 %v76
    %v283 = vunpack.c.h.b16 %v76
    %v284 = vunpack.c.l.b16 %v77
    %v285 = vunpack.c.h.b16 %v77
    %v286 = vunpack.c.l.b16 %v78
    %v287 = vunpack.c.h.b16 %v78
    %v288 = vunpack.c.l.b16 %v79
    %v289 = vunpack.c.h.b16 %v79
    %v290 = vunpack.c.l.b16 %v80
    %v291 = vunpack.c.h.b16 %v80
    %v292 = vpack.c.b16 %v166, %v164
    %v293 = vpack.c.b16 %v167, %v165
    %v294 = vpack.c.b16 %v170, %v168
    %v295 = vpack.c.b16 %v171, %v169
    %v296 = vpack.c.b16 %v174, %v172
    %v297 = vpack.c.b16 %v175, %v173
    %v298 = vpack.c.b16 %v178, %v176
    %v299 = vpack.c.b16 %v179, %v177
    %v300 = vpack.c.b16 %v182, %v180
    %v301 = vpack.c.b16 %v183, %v181
    %v302 = vpack.c.b16 %v186, %v184
    %v303 = vpack.c.b16 %v187, %v185
    %v304 = vpack.c.b16 %v190, %v188
    %v305 = vpack.c.b16 %v191, %v189
    %v306 = vpack.c.b16 %v194, %v192
    %v307 = vpack.c.b16 %v195, %v193
    %v308 = vpack.c.b16 %v198, %v196
    %v309 = vpack.c.b16 %v199, %v197
    %v310 = vpack.c.b16 %v202, %v200
    %v311 = vpack.c.b16 %v203, %v201
    %v312 = vpack.c.b16 %v206, %v204
    %v313 = vpack.c.b16 %v207, %v205
    %v314 = vpack.c.b16 %v210, %v208
    %v315 = vpack.c.b16 %v211, %v209
    %v316 = vpack.c.b16 %v214, %v212
    %v317 = vpack.c.b16 %v215, %v213
    %v318 = vpack.c.b16 %v218, %v216
    %v319 = vpack.c.b16 %v219, %v217
    %v320 = vpack.c.b16 %v222, %v220
    %v321 = vpack.c.b16 %v223, %v221
    %v322 = vpack.c.b16 %v226, %v224
    %v323 = vpack.c.b16 %v227, %v225
    %v324 = vpack.c.b16 %v230, %v228
    %v325 = vpack.c.b16 %v231, %v229
    %v326 = vpack.c.b16 %v234, %v232
    %v327 = vpack.c.b16 %v235, %v233
    %v328 = vpack.c.b16 %v238, %v236
    %v329 = vpack.c.b16 %v239, %v237
    %v330 = vpack.c.b16 %v242, %v240
    %v331 = vpack.c.b16 %v243, %v241
    %v332 = vpack.c.b16 %v246, %v244
    %v333 = vpack.c.b16 %v247, %v245
    %v334 = vpack.c.b16 %v250, %v248
    %v335 = vpack.c.b16 %v251, %v249
    %v336 = vpack.c.b16 %v254, %v252
    %v337 = vpack.c.b16 %v255, %v253
    %v338 = vpack.c.b16 %v258, %v256
    %v339 = vpack.c.b16 %v259, %v257
    %v340 = vpack.c.b16 %v262, %v260
    %v341 = vpack.c.b16 %v263, %v261
    %v342 = vpack.c.b16 %v266, %v264
    %v343 = vpack.c.b16 %v267, %v265
    %v344 = vpack.c.b16 %v270, %v268
    %v345 = vpack.c.b16 %v271, %v269
    %v346 = vpack.c.b16 %v274, %v272
    %v347 = vpack.c.b16 %v275, %v273
    %v348 = vpack.c.b16 %v278, %v276
    %v349 = vpack.c.b16 %v279, %v277
    %v350 = vpack.c.b16 %v282, %v280
    %v351 = vpack.c.b16 %v283, %v281
    %v352 = vpack.c.b16 %v286, %v284
    %v353 = vpack.c.b16 %v287, %v285
    %v354 = vpack.c.b16 %v290, %v288
    %v355 = vpack.c.b16 %v291, %v289
    %v407 = vunpack.c.l.b16 %v81
    %v408 = vunpack.c.l.b16 %v82
    %v409 = vunpack.c.l.b16 %v83
    %v410 = vunpack.c.l.b16 %v84
    %v411 = vunpack.c.l.b16 %v85
    %v412 = vunpack.c.l.b16 %v86
    %v413 = vunpack.c.l.b16 %v87
    %v414 = vunpack.c.l.b16 %v88
    %v415 = vunpack.c.l.b16 %v89
    %v416 = vunpack.c.l.b16 %v90
    %v417 = vunpack.c.l.b16 %v91
    %v418 = vunpack.c.l.b16 %v92
    %v419 = vunpack.c.l.b16 %v93
    %v420 = vunpack.c.l.b16 %v94
    %v421 = vunpack.c.l.b16 %v95
    %v422 = vunpack.c.l.b16 %v96
    %v423 = vunpack.c.l.b16 %v97
    %v424 = vunpack.c.l.b16 %v98
    %v425 = vunpack.c.l.b16 %v99
    %v426 = vpack.c.b16 %v408, %v407
    %v427 = vpack.c.b16 %v410, %v409
    %v428 = vpack.c.b16 %v412, %v411
    %v429 = vpack.c.b16 %v414, %v413
    %v430 = vpack.c.b16 %v416, %v415
    %v431 = vpack.c.b16 %v418, %v417
    %v432 = vpack.c.b16 %v420, %v419
    %v433 = vpack.c.b16 %v422, %v421
    %v434 = vpack.c.b16 %v424, %v423
    %v435 = vpack.c.b16 %v425, %v425
    %vm445 = vcmask 154624
    %v447 = vsel %vm445, %v293, 0
    %v450 = vsel %vm445, %v295, 0
    %v453 = vsel %vm445, %v297, 0
    %v456 = vsel %vm445, %v299, 0
    %v459 = vsel %vm445, %v301, 0
    %v462 = vsel %vm445, %v303, 0
    %v465 = vsel %vm445, %v305, 0
    %v468 = vsel %vm445, %v307, 0
    %v471 = vsel %vm445, %v309, 0
    %v474 = vsel %vm445, %v311, 0
    %v477 = vsel %vm445, %v313, 0
    %v480 = vsel %vm445, %v315, 0
    %v483 = vsel %vm445, %v317, 0
    %v486 = vsel %vm445, %v319, 0
    %v489 = vsel %vm445, %v321, 0
    %v492 = vsel %vm445, %v323, 0
    %v495 = vsel %vm445, %v325, 0
    %v498 = vsel %vm445, %v327, 0
    %v501 = vsel %vm445, %v329, 0
    %v504 = vsel %vm445, %v331, 0
    %v507 = vsel %vm445, %v333, 0
    %v510 = vsel %vm445, %v335, 0
    %v513 = vsel %vm445, %v337, 0
    %v516 = vsel %vm445, %v339, 0
    %v519 = vsel %vm445, %v341, 0
    %v522 = vsel %vm445, %v343, 0
    %v525 = vsel %vm445, %v345, 0
    %v528 = vsel %vm445, %v347, 0
    %v531 = vsel %vm445, %v349, 0
    %v534 = vsel %vm445, %v351, 0
    %v537 = vsel %vm445, %v353, 0
    %v540 = vsel %vm445, %v355, 0
    %vm542 = vcmask 1040384
    %vm543 = vcmask 1041408
    %v544 = vsel %vm542, 4294967295, 65535
    %v545 = vsel %vm543, %v544, 0
    %v547 = vand.u32 %v435, %v545
    %549 = vmatpush.bf16.msra.mxu0 %v433
    %550 = vmatpush.bf16.msra.mxu0 %v432
    %551 = vmatpush.bf16.msra.mxu0 %v431
    %552 = vmatpush.bf16.msra.mxu0 %v430
    %553 = vmatpush.bf16.msra.mxu0 %v429
    %554 = vmatpush.bf16.msra.mxu0 %v428
    %555 = vmatpush.bf16.msra.mxu0 %v427
    %556 = vmatpush.bf16.msra.mxu0 %v426
    %557 = vmatmul.bf16.gmra.mxu0 %v292
    %v558 = vpop.f32.mrf.mxu0
    %v559 = vadd.f32 0.0, %v558
    %v560 = vpop.f32.mrf.mxu0
    %v561 = vadd.f32 0.0, %v560
    %562 = vmatmul.bf16.gmra.mxu0 %v294
    %v563 = vpop.f32.mrf.mxu0
    %v564 = vadd.f32 0.0, %v563
    %v565 = vpop.f32.mrf.mxu0
    %v566 = vadd.f32 0.0, %v565
    %567 = vmatmul.bf16.gmra.mxu0 %v296
    %v568 = vpop.f32.mrf.mxu0
    %v569 = vadd.f32 0.0, %v568
    %v570 = vpop.f32.mrf.mxu0
    %v571 = vadd.f32 0.0, %v570
    %572 = vmatmul.bf16.gmra.mxu0 %v298
    %v573 = vpop.f32.mrf.mxu0
    %v574 = vadd.f32 0.0, %v573
    %v575 = vpop.f32.mrf.mxu0
    %v576 = vadd.f32 0.0, %v575
    %577 = vmatmul.bf16.gmra.mxu0 %v300
    %v578 = vpop.f32.mrf.mxu0
    %v579 = vadd.f32 0.0, %v578
    %v580 = vpop.f32.mrf.mxu0
    %v581 = vadd.f32 0.0, %v580
    %582 = vmatmul.bf16.gmra.mxu0 %v302
    %v583 = vpop.f32.mrf.mxu0
    %v584 = vadd.f32 0.0, %v583
    %v585 = vpop.f32.mrf.mxu0
    %v586 = vadd.f32 0.0, %v585
    %587 = vmatmul.bf16.gmra.mxu0 %v304
    %v588 = vpop.f32.mrf.mxu0
    %v589 = vadd.f32 0.0, %v588
    %v590 = vpop.f32.mrf.mxu0
    %v591 = vadd.f32 0.0, %v590
    %592 = vmatmul.bf16.gmra.mxu0 %v306
    %v593 = vpop.f32.mrf.mxu0
    %v594 = vadd.f32 0.0, %v593
    %v595 = vpop.f32.mrf.mxu0
    %v596 = vadd.f32 0.0, %v595
    %597 = vmatmul.bf16.gmra.mxu0 %v308
    %v598 = vpop.f32.mrf.mxu0
    %v599 = vadd.f32 0.0, %v598
    %v600 = vpop.f32.mrf.mxu0
    %v601 = vadd.f32 0.0, %v600
    %602 = vmatmul.bf16.gmra.mxu0 %v310
    %v603 = vpop.f32.mrf.mxu0
    %v604 = vadd.f32 0.0, %v603
    %v605 = vpop.f32.mrf.mxu0
    %v606 = vadd.f32 0.0, %v605
    %607 = vmatmul.bf16.gmra.mxu0 %v312
    %v608 = vpop.f32.mrf.mxu0
    %v609 = vadd.f32 0.0, %v608
    %v610 = vpop.f32.mrf.mxu0
    %v611 = vadd.f32 0.0, %v610
    %612 = vmatmul.bf16.gmra.mxu0 %v314
    %v613 = vpop.f32.mrf.mxu0
    %v614 = vadd.f32 0.0, %v613
    %v615 = vpop.f32.mrf.mxu0
    %v616 = vadd.f32 0.0, %v615
    %617 = vmatmul.bf16.gmra.mxu0 %v316
    %v618 = vpop.f32.mrf.mxu0
    %v619 = vadd.f32 0.0, %v618
    %v620 = vpop.f32.mrf.mxu0
    %v621 = vadd.f32 0.0, %v620
    %622 = vmatmul.bf16.gmra.mxu0 %v318
    %v623 = vpop.f32.mrf.mxu0
    %v624 = vadd.f32 0.0, %v623
    %v625 = vpop.f32.mrf.mxu0
    %v626 = vadd.f32 0.0, %v625
    %627 = vmatmul.bf16.gmra.mxu0 %v320
    %v628 = vpop.f32.mrf.mxu0
    %v629 = vadd.f32 0.0, %v628
    %v630 = vpop.f32.mrf.mxu0
    %v631 = vadd.f32 0.0, %v630
    %632 = vmatmul.bf16.gmra.mxu0 %v322
    %v633 = vpop.f32.mrf.mxu0
    %v634 = vadd.f32 0.0, %v633
    %v635 = vpop.f32.mrf.mxu0
    %v636 = vadd.f32 0.0, %v635
    %637 = vmatmul.bf16.gmra.mxu0 %v324
    %v638 = vpop.f32.mrf.mxu0
    %v639 = vadd.f32 0.0, %v638
    %v640 = vpop.f32.mrf.mxu0
    %v641 = vadd.f32 0.0, %v640
    %642 = vmatmul.bf16.gmra.mxu0 %v326
    %v643 = vpop.f32.mrf.mxu0
    %v644 = vadd.f32 0.0, %v643
    %v645 = vpop.f32.mrf.mxu0
    %v646 = vadd.f32 0.0, %v645
    %647 = vmatmul.bf16.gmra.mxu0 %v328
    %v648 = vpop.f32.mrf.mxu0
    %v649 = vadd.f32 0.0, %v648
    %v650 = vpop.f32.mrf.mxu0
    %v651 = vadd.f32 0.0, %v650
    %652 = vmatmul.bf16.gmra.mxu0 %v330
    %v653 = vpop.f32.mrf.mxu0
    %v654 = vadd.f32 0.0, %v653
    %v655 = vpop.f32.mrf.mxu0
    %v656 = vadd.f32 0.0, %v655
    %657 = vmatmul.bf16.gmra.mxu0 %v332
    %v658 = vpop.f32.mrf.mxu0
    %v659 = vadd.f32 0.0, %v658
    %v660 = vpop.f32.mrf.mxu0
    %v661 = vadd.f32 0.0, %v660
    %662 = vmatmul.bf16.gmra.mxu0 %v334
    %v663 = vpop.f32.mrf.mxu0
    %v664 = vadd.f32 0.0, %v663
    %v665 = vpop.f32.mrf.mxu0
    %v666 = vadd.f32 0.0, %v665
    %667 = vmatmul.bf16.gmra.mxu0 %v336
    %v668 = vpop.f32.mrf.mxu0
    %v669 = vadd.f32 0.0, %v668
    %v670 = vpop.f32.mrf.mxu0
    %v671 = vadd.f32 0.0, %v670
    %672 = vmatmul.bf16.gmra.mxu0 %v338
    %v673 = vpop.f32.mrf.mxu0
    %v674 = vadd.f32 0.0, %v673
    %v675 = vpop.f32.mrf.mxu0
    %v676 = vadd.f32 0.0, %v675
    %677 = vmatmul.bf16.gmra.mxu0 %v340
    %v678 = vpop.f32.mrf.mxu0
    %v679 = vadd.f32 0.0, %v678
    %v680 = vpop.f32.mrf.mxu0
    %v681 = vadd.f32 0.0, %v680
    %682 = vmatmul.bf16.gmra.mxu0 %v342
    %v683 = vpop.f32.mrf.mxu0
    %v684 = vadd.f32 0.0, %v683
    %v685 = vpop.f32.mrf.mxu0
    %v686 = vadd.f32 0.0, %v685
    %687 = vmatmul.bf16.gmra.mxu0 %v344
    %v688 = vpop.f32.mrf.mxu0
    %v689 = vadd.f32 0.0, %v688
    %v690 = vpop.f32.mrf.mxu0
    %v691 = vadd.f32 0.0, %v690
    %692 = vmatmul.bf16.gmra.mxu0 %v346
    %v693 = vpop.f32.mrf.mxu0
    %v694 = vadd.f32 0.0, %v693
    %v695 = vpop.f32.mrf.mxu0
    %v696 = vadd.f32 0.0, %v695
    %697 = vmatmul.bf16.gmra.mxu0 %v348
    %v698 = vpop.f32.mrf.mxu0
    %v699 = vadd.f32 0.0, %v698
    %v700 = vpop.f32.mrf.mxu0
    %v701 = vadd.f32 0.0, %v700
    %702 = vmatmul.bf16.gmra.mxu0 %v350
    %v703 = vpop.f32.mrf.mxu0
    %v704 = vadd.f32 0.0, %v703
    %v705 = vpop.f32.mrf.mxu0
    %v706 = vadd.f32 0.0, %v705
    %707 = vmatmul.bf16.gmra.mxu0 %v352
    %v708 = vpop.f32.mrf.mxu0
    %v709 = vadd.f32 0.0, %v708
    %v710 = vpop.f32.mrf.mxu0
    %v711 = vadd.f32 0.0, %v710
    %712 = vmatmul.bf16.gmra.mxu0 %v354
    %v713 = vpop.f32.mrf.mxu0
    %v714 = vadd.f32 0.0, %v713
    %v715 = vpop.f32.mrf.mxu0
    %v716 = vadd.f32 0.0, %v715
    %717 = vdwg.mxu0
    %718 = vmatpush.bf16.msra.mxu0 0
    %719 = vmatpush.bf16.msra.mxu0 0
    %720 = vmatpush.bf16.msra.mxu0 0
    %721 = vmatpush.bf16.msra.mxu0 0
    %722 = vmatpush.bf16.msra.mxu0 0
    %723 = vmatpush.bf16.msra.mxu0 0
    %724 = vmatpush.bf16.msra.mxu0 %v547
    %725 = vmatpush.bf16.msra.mxu0 %v434
    %726 = vmatmul.bf16.gmra.mxu0 %v447
    %v727 = vpop.f32.mrf.mxu0
    %v728 = vadd.f32 %v559, %v727
    %v729 = vpop.f32.mrf.mxu0
    %v730 = vadd.f32 %v561, %v729
    %731 = vmatmul.bf16.gmra.mxu0 %v450
    %v732 = vpop.f32.mrf.mxu0
    %v733 = vadd.f32 %v564, %v732
    %v734 = vpop.f32.mrf.mxu0
    %v735 = vadd.f32 %v566, %v734
    %736 = vmatmul.bf16.gmra.mxu0 %v453
    %v737 = vpop.f32.mrf.mxu0
    %v738 = vadd.f32 %v569, %v737
    %v739 = vpop.f32.mrf.mxu0
    %v740 = vadd.f32 %v571, %v739
    %741 = vmatmul.bf16.gmra.mxu0 %v456
    %v742 = vpop.f32.mrf.mxu0
    %v743 = vadd.f32 %v574, %v742
    %v744 = vpop.f32.mrf.mxu0
    %v745 = vadd.f32 %v576, %v744
    %746 = vmatmul.bf16.gmra.mxu0 %v459
    %v747 = vpop.f32.mrf.mxu0
    %v748 = vadd.f32 %v579, %v747
    %v749 = vpop.f32.mrf.mxu0
    %v750 = vadd.f32 %v581, %v749
    %751 = vmatmul.bf16.gmra.mxu0 %v462
    %v752 = vpop.f32.mrf.mxu0
    %v753 = vadd.f32 %v584, %v752
    %v754 = vpop.f32.mrf.mxu0
    %v755 = vadd.f32 %v586, %v754
    %756 = vmatmul.bf16.gmra.mxu0 %v465
    %v757 = vpop.f32.mrf.mxu0
    %v758 = vadd.f32 %v589, %v757
    %v759 = vpop.f32.mrf.mxu0
    %v760 = vadd.f32 %v591, %v759
    %761 = vmatmul.bf16.gmra.mxu0 %v468
    %v762 = vpop.f32.mrf.mxu0
    %v763 = vadd.f32 %v594, %v762
    %v764 = vpop.f32.mrf.mxu0
    %v765 = vadd.f32 %v596, %v764
    %766 = vmatmul.bf16.gmra.mxu0 %v471
    %v767 = vpop.f32.mrf.mxu0
    %v768 = vadd.f32 %v599, %v767
    %v769 = vpop.f32.mrf.mxu0
    %v770 = vadd.f32 %v601, %v769
    %771 = vmatmul.bf16.gmra.mxu0 %v474
    %v772 = vpop.f32.mrf.mxu0
    %v773 = vadd.f32 %v604, %v772
    %v774 = vpop.f32.mrf.mxu0
    %v775 = vadd.f32 %v606, %v774
    %776 = vmatmul.bf16.gmra.mxu0 %v477
    %v777 = vpop.f32.mrf.mxu0
    %v778 = vadd.f32 %v609, %v777
    %v779 = vpop.f32.mrf.mxu0
    %v780 = vadd.f32 %v611, %v779
    %781 = vmatmul.bf16.gmra.mxu0 %v480
    %v782 = vpop.f32.mrf.mxu0
    %v783 = vadd.f32 %v614, %v782
    %v784 = vpop.f32.mrf.mxu0
    %v785 = vadd.f32 %v616, %v784
    %786 = vmatmul.bf16.gmra.mxu0 %v483
    %v787 = vpop.f32.mrf.mxu0
    %v788 = vadd.f32 %v619, %v787
    %v789 = vpop.f32.mrf.mxu0
    %v790 = vadd.f32 %v621, %v789
    %791 = vmatmul.bf16.gmra.mxu0 %v486
    %v792 = vpop.f32.mrf.mxu0
    %v793 = vadd.f32 %v624, %v792
    %v794 = vpop.f32.mrf.mxu0
    %v795 = vadd.f32 %v626, %v794
    %796 = vmatmul.bf16.gmra.mxu0 %v489
    %v797 = vpop.f32.mrf.mxu0
    %v798 = vadd.f32 %v629, %v797
    %v799 = vpop.f32.mrf.mxu0
    %v800 = vadd.f32 %v631, %v799
    %801 = vmatmul.bf16.gmra.mxu0 %v492
    %v802 = vpop.f32.mrf.mxu0
    %v803 = vadd.f32 %v634, %v802
    %v804 = vpop.f32.mrf.mxu0
    %v805 = vadd.f32 %v636, %v804
    %806 = vmatmul.bf16.gmra.mxu0 %v495
    %v807 = vpop.f32.mrf.mxu0
    %v808 = vadd.f32 %v639, %v807
    %v809 = vpop.f32.mrf.mxu0
    %v810 = vadd.f32 %v641, %v809
    %811 = vmatmul.bf16.gmra.mxu0 %v498
    %v812 = vpop.f32.mrf.mxu0
    %v813 = vadd.f32 %v644, %v812
    %v814 = vpop.f32.mrf.mxu0
    %v815 = vadd.f32 %v646, %v814
    %816 = vmatmul.bf16.gmra.mxu0 %v501
    %v817 = vpop.f32.mrf.mxu0
    %v818 = vadd.f32 %v649, %v817
    %v819 = vpop.f32.mrf.mxu0
    %v820 = vadd.f32 %v651, %v819
    %821 = vmatmul.bf16.gmra.mxu0 %v504
    %v822 = vpop.f32.mrf.mxu0
    %v823 = vadd.f32 %v654, %v822
    %v824 = vpop.f32.mrf.mxu0
    %v825 = vadd.f32 %v656, %v824
    %826 = vmatmul.bf16.gmra.mxu0 %v507
    %v827 = vpop.f32.mrf.mxu0
    %v828 = vadd.f32 %v659, %v827
    %v829 = vpop.f32.mrf.mxu0
    %v830 = vadd.f32 %v661, %v829
    %831 = vmatmul.bf16.gmra.mxu0 %v510
    %v832 = vpop.f32.mrf.mxu0
    %v833 = vadd.f32 %v664, %v832
    %v834 = vpop.f32.mrf.mxu0
    %v835 = vadd.f32 %v666, %v834
    %836 = vmatmul.bf16.gmra.mxu0 %v513
    %v837 = vpop.f32.mrf.mxu0
    %v838 = vadd.f32 %v669, %v837
    %v839 = vpop.f32.mrf.mxu0
    %v840 = vadd.f32 %v671, %v839
    %841 = vmatmul.bf16.gmra.mxu0 %v516
    %v842 = vpop.f32.mrf.mxu0
    %v843 = vadd.f32 %v674, %v842
    %v844 = vpop.f32.mrf.mxu0
    %v845 = vadd.f32 %v676, %v844
    %846 = vmatmul.bf16.gmra.mxu0 %v519
    %v847 = vpop.f32.mrf.mxu0
    %v848 = vadd.f32 %v679, %v847
    %v849 = vpop.f32.mrf.mxu0
    %v850 = vadd.f32 %v681, %v849
    %851 = vmatmul.bf16.gmra.mxu0 %v522
    %v852 = vpop.f32.mrf.mxu0
    %v853 = vadd.f32 %v684, %v852
    %v854 = vpop.f32.mrf.mxu0
    %v855 = vadd.f32 %v686, %v854
    %856 = vmatmul.bf16.gmra.mxu0 %v525
    %v857 = vpop.f32.mrf.mxu0
    %v858 = vadd.f32 %v689, %v857
    %v859 = vpop.f32.mrf.mxu0
    %v860 = vadd.f32 %v691, %v859
    %861 = vmatmul.bf16.gmra.mxu0 %v528
    %v862 = vpop.f32.mrf.mxu0
    %v863 = vadd.f32 %v694, %v862
    %v864 = vpop.f32.mrf.mxu0
    %v865 = vadd.f32 %v696, %v864
    %866 = vmatmul.bf16.gmra.mxu0 %v531
    %v867 = vpop.f32.mrf.mxu0
    %v868 = vadd.f32 %v699, %v867
    %v869 = vpop.f32.mrf.mxu0
    %v870 = vadd.f32 %v701, %v869
    %871 = vmatmul.bf16.gmra.mxu0 %v534
    %v872 = vpop.f32.mrf.mxu0
    %v873 = vadd.f32 %v704, %v872
    %v874 = vpop.f32.mrf.mxu0
    %v875 = vadd.f32 %v706, %v874
    %876 = vmatmul.bf16.gmra.mxu0 %v537
    %v877 = vpop.f32.mrf.mxu0
    %v878 = vadd.f32 %v709, %v877
    %v879 = vpop.f32.mrf.mxu0
    %v880 = vadd.f32 %v711, %v879
    %881 = vmatmul.bf16.gmra.mxu0 %v540
    %v882 = vpop.f32.mrf.mxu0
    %v883 = vadd.f32 %v714, %v882
    %v884 = vpop.f32.mrf.mxu0
    %v885 = vadd.f32 %v716, %v884
    %886 = vdwg.mxu0
    %v887 = vpack.c.bf16 %v728, %v728
    %v888 = vpack.c.bf16 %v730, %v730
    %v889 = vpack.c.bf16 %v733, %v733
    %v890 = vpack.c.bf16 %v735, %v735
    %v891 = vpack.c.bf16 %v738, %v738
    %v892 = vpack.c.bf16 %v740, %v740
    %v893 = vpack.c.bf16 %v743, %v743
    %v894 = vpack.c.bf16 %v745, %v745
    %v895 = vpack.c.bf16 %v748, %v748
    %v896 = vpack.c.bf16 %v750, %v750
    %v897 = vpack.c.bf16 %v753, %v753
    %v898 = vpack.c.bf16 %v755, %v755
    %v899 = vpack.c.bf16 %v758, %v758
    %v900 = vpack.c.bf16 %v760, %v760
    %v901 = vpack.c.bf16 %v763, %v763
    %v902 = vpack.c.bf16 %v765, %v765
    %v903 = vpack.c.bf16 %v768, %v768
    %v904 = vpack.c.bf16 %v770, %v770
    %v905 = vpack.c.bf16 %v773, %v773
    %v906 = vpack.c.bf16 %v775, %v775
    %v907 = vpack.c.bf16 %v778, %v778
    %v908 = vpack.c.bf16 %v780, %v780
    %v909 = vpack.c.bf16 %v783, %v783
    %v910 = vpack.c.bf16 %v785, %v785
    %v911 = vpack.c.bf16 %v788, %v788
    %v912 = vpack.c.bf16 %v790, %v790
    %v913 = vpack.c.bf16 %v793, %v793
    %v914 = vpack.c.bf16 %v795, %v795
    %v915 = vpack.c.bf16 %v798, %v798
    %v916 = vpack.c.bf16 %v800, %v800
    %v917 = vpack.c.bf16 %v803, %v803
    %v918 = vpack.c.bf16 %v805, %v805
    %v919 = vpack.c.bf16 %v808, %v808
    %v920 = vpack.c.bf16 %v810, %v810
    %v921 = vpack.c.bf16 %v813, %v813
    %v922 = vpack.c.bf16 %v815, %v815
    %v923 = vpack.c.bf16 %v818, %v818
    %v924 = vpack.c.bf16 %v820, %v820
    %v925 = vpack.c.bf16 %v823, %v823
    %v926 = vpack.c.bf16 %v825, %v825
    %v927 = vpack.c.bf16 %v828, %v828
    %v928 = vpack.c.bf16 %v830, %v830
    %v929 = vpack.c.bf16 %v833, %v833
    %v930 = vpack.c.bf16 %v835, %v835
    %v931 = vpack.c.bf16 %v838, %v838
    %v932 = vpack.c.bf16 %v840, %v840
    %v933 = vpack.c.bf16 %v843, %v843
    %v934 = vpack.c.bf16 %v845, %v845
    %v935 = vpack.c.bf16 %v848, %v848
    %v936 = vpack.c.bf16 %v850, %v850
    %v937 = vpack.c.bf16 %v853, %v853
    %v938 = vpack.c.bf16 %v855, %v855
    %v939 = vpack.c.bf16 %v858, %v858
    %v940 = vpack.c.bf16 %v860, %v860
    %v941 = vpack.c.bf16 %v863, %v863
    %v942 = vpack.c.bf16 %v865, %v865
    %v943 = vpack.c.bf16 %v868, %v868
    %v944 = vpack.c.bf16 %v870, %v870
    %v945 = vpack.c.bf16 %v873, %v873
    %v946 = vpack.c.bf16 %v875, %v875
    %v947 = vpack.c.bf16 %v878, %v878
    %v948 = vpack.c.bf16 %v880, %v880
    %v949 = vpack.c.bf16 %v883, %v883
    %v950 = vpack.c.bf16 %v885, %v885
    %vm951 = vcmask 519168
    %952 = vst.msk [vmem:[%s2] sm:$0xf] %vm951, %v887
    %953 = vst.msk [vmem:[%s2 + $0x4] sm:$0xf] %vm951, %v888
    %954 = vst.msk [vmem:[%s2 + $0x8] sm:$0xf] %vm951, %v889
    %955 = vst.msk [vmem:[%s2 + $0xc] sm:$0xf] %vm951, %v890
    %956 = vst.msk [vmem:[%s2 + $0x10] sm:$0xf] %vm951, %v891
    %957 = vst.msk [vmem:[%s2 + $0x14] sm:$0xf] %vm951, %v892
    %958 = vst.msk [vmem:[%s2 + $0x18] sm:$0xf] %vm951, %v893
    %959 = vst.msk [vmem:[%s2 + $0x1c] sm:$0xf] %vm951, %v894
    %960 = vst.msk [vmem:[%s2 + $0x20] sm:$0xf] %vm951, %v895
    %961 = vst.msk [vmem:[%s2 + $0x24] sm:$0xf] %vm951, %v896
    %962 = vst.msk [vmem:[%s2 + $0x28] sm:$0xf] %vm951, %v897
    %963 = vst.msk [vmem:[%s2 + $0x2c] sm:$0xf] %vm951, %v898
    %964 = vst.msk [vmem:[%s2 + $0x30] sm:$0xf] %vm951, %v899
    %965 = vst.msk [vmem:[%s2 + $0x34] sm:$0xf] %vm951, %v900
    %966 = vst.msk [vmem:[%s2 + $0x38] sm:$0xf] %vm951, %v901
    %967 = vst.msk [vmem:[%s2 + $0x3c] sm:$0xf] %vm951, %v902
    %968 = vst.msk [vmem:[%s2 + $0x40] sm:$0xf] %vm951, %v903
    %969 = vst.msk [vmem:[%s2 + $0x44] sm:$0xf] %vm951, %v904
    %970 = vst.msk [vmem:[%s2 + $0x48] sm:$0xf] %vm951, %v905
    %971 = vst.msk [vmem:[%s2 + $0x4c] sm:$0xf] %vm951, %v906
    %972 = vst.msk [vmem:[%s2 + $0x50] sm:$0xf] %vm951, %v907
    %973 = vst.msk [vmem:[%s2 + $0x54] sm:$0xf] %vm951, %v908
    %974 = vst.msk [vmem:[%s2 + $0x58] sm:$0xf] %vm951, %v909
    %975 = vst.msk [vmem:[%s2 + $0x5c] sm:$0xf] %vm951, %v910
    %976 = vst.msk [vmem:[%s2 + $0x60] sm:$0xf] %vm951, %v911
    %977 = vst.msk [vmem:[%s2 + $0x64] sm:$0xf] %vm951, %v912
    %978 = vst.msk [vmem:[%s2 + $0x68] sm:$0xf] %vm951, %v913
    %979 = vst.msk [vmem:[%s2 + $0x6c] sm:$0xf] %vm951, %v914
    %980 = vst.msk [vmem:[%s2 + $0x70] sm:$0xf] %vm951, %v915
    %981 = vst.msk [vmem:[%s2 + $0x74] sm:$0xf] %vm951, %v916
    %982 = vst.msk [vmem:[%s2 + $0x78] sm:$0xf] %vm951, %v917
    %983 = vst.msk [vmem:[%s2 + $0x7c] sm:$0xf] %vm951, %v918
    %984 = vst.msk [vmem:[%s2 + $0x80] sm:$0xf] %vm951, %v919
    %985 = vst.msk [vmem:[%s2 + $0x84] sm:$0xf] %vm951, %v920
    %986 = vst.msk [vmem:[%s2 + $0x88] sm:$0xf] %vm951, %v921
    %987 = vst.msk [vmem:[%s2 + $0x8c] sm:$0xf] %vm951, %v922
    %988 = vst.msk [vmem:[%s2 + $0x90] sm:$0xf] %vm951, %v923
    %989 = vst.msk [vmem:[%s2 + $0x94] sm:$0xf] %vm951, %v924
    %990 = vst.msk [vmem:[%s2 + $0x98] sm:$0xf] %vm951, %v925
    %991 = vst.msk [vmem:[%s2 + $0x9c] sm:$0xf] %vm951, %v926
    %992 = vst.msk [vmem:[%s2 + $0xa0] sm:$0xf] %vm951, %v927
    %993 = vst.msk [vmem:[%s2 + $0xa4] sm:$0xf] %vm951, %v928
    %994 = vst.msk [vmem:[%s2 + $0xa8] sm:$0xf] %vm951, %v929
    %995 = vst.msk [vmem:[%s2 + $0xac] sm:$0xf] %vm951, %v930
    %996 = vst.msk [vmem:[%s2 + $0xb0] sm:$0xf] %vm951, %v931
    %997 = vst.msk [vmem:[%s2 + $0xb4] sm:$0xf] %vm951, %v932
    %998 = vst.msk [vmem:[%s2 + $0xb8] sm:$0xf] %vm951, %v933
    %999 = vst.msk [vmem:[%s2 + $0xbc] sm:$0xf] %vm951, %v934
    %1000 = vst.msk [vmem:[%s2 + $0xc0] sm:$0xf] %vm951, %v935
    %1001 = vst.msk [vmem:[%s2 + $0xc4] sm:$0xf] %vm951, %v936
    %1002 = vst.msk [vmem:[%s2 + $0xc8] sm:$0xf] %vm951, %v937
    %1003 = vst.msk [vmem:[%s2 + $0xcc] sm:$0xf] %vm951, %v938
    %1004 = vst.msk [vmem:[%s2 + $0xd0] sm:$0xf] %vm951, %v939
    %1005 = vst.msk [vmem:[%s2 + $0xd4] sm:$0xf] %vm951, %v940
    %1006 = vst.msk [vmem:[%s2 + $0xd8] sm:$0xf] %vm951, %v941
    %1007 = vst.msk [vmem:[%s2 + $0xdc] sm:$0xf] %vm951, %v942
    %1008 = vst.msk [vmem:[%s2 + $0xe0] sm:$0xf] %vm951, %v943
    %1009 = vst.msk [vmem:[%s2 + $0xe4] sm:$0xf] %vm951, %v944
    %1010 = vst.msk [vmem:[%s2 + $0xe8] sm:$0xf] %vm951, %v945
    %1011 = vst.msk [vmem:[%s2 + $0xec] sm:$0xf] %vm951, %v946
    %1012 = vst.msk [vmem:[%s2 + $0xf0] sm:$0xf] %vm951, %v947
    %1013 = vst.msk [vmem:[%s2 + $0xf4] sm:$0xf] %vm951, %v948
    %1014 = vst.msk [vmem:[%s2 + $0xf8] sm:$0xf] %vm951, %v949
    %1015 = vst.msk [vmem:[%s2 + $0xfc] sm:$0xf] %vm951, %v950
    %vm1016 = vcmask 523264
    %v1017 = vsel %vm1016, %v728, 0.0
    %v1018 = vsel %vm1016, %v730, 0.0
    %v1019 = vadd.f32 %v1017, %v1018
    %v1020 = vsel %vm1016, %v733, 0.0
    %v1021 = vadd.f32 %v1019, %v1020
    %v1022 = vsel %vm1016, %v735, 0.0
    %v1023 = vadd.f32 %v1021, %v1022
    %v1024 = vsel %vm1016, %v738, 0.0
    %v1025 = vadd.f32 %v1023, %v1024
    %v1026 = vsel %vm1016, %v740, 0.0
    %v1027 = vadd.f32 %v1025, %v1026
    %v1028 = vsel %vm1016, %v743, 0.0
    %v1029 = vadd.f32 %v1027, %v1028
    %v1030 = vsel %vm1016, %v745, 0.0
    %v1031 = vadd.f32 %v1029, %v1030
    %v1032 = vsel %vm1016, %v748, 0.0
    %v1033 = vadd.f32 %v1031, %v1032
    %v1034 = vsel %vm1016, %v750, 0.0
    %v1035 = vadd.f32 %v1033, %v1034
    %v1036 = vsel %vm1016, %v753, 0.0
    %v1037 = vadd.f32 %v1035, %v1036
    %v1038 = vsel %vm1016, %v755, 0.0
    %v1039 = vadd.f32 %v1037, %v1038
    %v1040 = vsel %vm1016, %v758, 0.0
    %v1041 = vadd.f32 %v1039, %v1040
    %v1042 = vsel %vm1016, %v760, 0.0
    %v1043 = vadd.f32 %v1041, %v1042
    %v1044 = vsel %vm1016, %v763, 0.0
    %v1045 = vadd.f32 %v1043, %v1044
    %v1046 = vsel %vm1016, %v765, 0.0
    %v1047 = vadd.f32 %v1045, %v1046
    %v1048 = vsel %vm1016, %v768, 0.0
    %v1049 = vadd.f32 %v1047, %v1048
    %v1050 = vsel %vm1016, %v770, 0.0
    %v1051 = vadd.f32 %v1049, %v1050
    %v1052 = vsel %vm1016, %v773, 0.0
    %v1053 = vadd.f32 %v1051, %v1052
    %v1054 = vsel %vm1016, %v775, 0.0
    %v1055 = vadd.f32 %v1053, %v1054
    %v1056 = vsel %vm1016, %v778, 0.0
    %v1057 = vadd.f32 %v1055, %v1056
    %v1058 = vsel %vm1016, %v780, 0.0
    %v1059 = vadd.f32 %v1057, %v1058
    %v1060 = vsel %vm1016, %v783, 0.0
    %v1061 = vadd.f32 %v1059, %v1060
    %v1062 = vsel %vm1016, %v785, 0.0
    %v1063 = vadd.f32 %v1061, %v1062
    %v1064 = vsel %vm1016, %v788, 0.0
    %v1065 = vadd.f32 %v1063, %v1064
    %v1066 = vsel %vm1016, %v790, 0.0
    %v1067 = vadd.f32 %v1065, %v1066
    %v1068 = vsel %vm1016, %v793, 0.0
    %v1069 = vadd.f32 %v1067, %v1068
    %v1070 = vsel %vm1016, %v795, 0.0
    %v1071 = vadd.f32 %v1069, %v1070
    %v1072 = vsel %vm1016, %v798, 0.0
    %v1073 = vadd.f32 %v1071, %v1072
    %v1074 = vsel %vm1016, %v800, 0.0
    %v1075 = vadd.f32 %v1073, %v1074
    %v1076 = vsel %vm1016, %v803, 0.0
    %v1077 = vadd.f32 %v1075, %v1076
    %v1078 = vsel %vm1016, %v805, 0.0
    %v1079 = vadd.f32 %v1077, %v1078
    %v1080 = vsel %vm1016, %v808, 0.0
    %v1081 = vadd.f32 %v1079, %v1080
    %v1082 = vsel %vm1016, %v810, 0.0
    %v1083 = vadd.f32 %v1081, %v1082
    %v1084 = vsel %vm1016, %v813, 0.0
    %v1085 = vadd.f32 %v1083, %v1084
    %v1086 = vsel %vm1016, %v815, 0.0
    %v1087 = vadd.f32 %v1085, %v1086
    %v1088 = vsel %vm1016, %v818, 0.0
    %v1089 = vadd.f32 %v1087, %v1088
    %v1090 = vsel %vm1016, %v820, 0.0
    %v1091 = vadd.f32 %v1089, %v1090
    %v1092 = vsel %vm1016, %v823, 0.0
    %v1093 = vadd.f32 %v1091, %v1092
    %v1094 = vsel %vm1016, %v825, 0.0
    %v1095 = vadd.f32 %v1093, %v1094
    %v1096 = vsel %vm1016, %v828, 0.0
    %v1097 = vadd.f32 %v1095, %v1096
    %v1098 = vsel %vm1016, %v830, 0.0
    %v1099 = vadd.f32 %v1097, %v1098
    %v1100 = vsel %vm1016, %v833, 0.0
    %v1101 = vadd.f32 %v1099, %v1100
    %v1102 = vsel %vm1016, %v835, 0.0
    %v1103 = vadd.f32 %v1101, %v1102
    %v1104 = vsel %vm1016, %v838, 0.0
    %v1105 = vadd.f32 %v1103, %v1104
    %v1106 = vsel %vm1016, %v840, 0.0
    %v1107 = vadd.f32 %v1105, %v1106
    %v1108 = vsel %vm1016, %v843, 0.0
    %v1109 = vadd.f32 %v1107, %v1108
    %v1110 = vsel %vm1016, %v845, 0.0
    %v1111 = vadd.f32 %v1109, %v1110
    %v1112 = vsel %vm1016, %v848, 0.0
    %v1113 = vadd.f32 %v1111, %v1112
    %v1114 = vsel %vm1016, %v850, 0.0
    %v1115 = vadd.f32 %v1113, %v1114
    %v1116 = vsel %vm1016, %v853, 0.0
    %v1117 = vadd.f32 %v1115, %v1116
    %v1118 = vsel %vm1016, %v855, 0.0
    %v1119 = vadd.f32 %v1117, %v1118
    %v1120 = vsel %vm1016, %v858, 0.0
    %v1121 = vadd.f32 %v1119, %v1120
    %v1122 = vsel %vm1016, %v860, 0.0
    %v1123 = vadd.f32 %v1121, %v1122
    %v1124 = vsel %vm1016, %v863, 0.0
    %v1125 = vadd.f32 %v1123, %v1124
    %v1126 = vsel %vm1016, %v865, 0.0
    %v1127 = vadd.f32 %v1125, %v1126
    %v1128 = vsel %vm1016, %v868, 0.0
    %v1129 = vadd.f32 %v1127, %v1128
    %v1130 = vsel %vm1016, %v870, 0.0
    %v1131 = vadd.f32 %v1129, %v1130
    %v1132 = vsel %vm1016, %v873, 0.0
    %v1133 = vadd.f32 %v1131, %v1132
    %v1134 = vsel %vm1016, %v875, 0.0
    %v1135 = vadd.f32 %v1133, %v1134
    %v1136 = vsel %vm1016, %v878, 0.0
    %v1137 = vadd.f32 %v1135, %v1136
    %v1138 = vsel %vm1016, %v880, 0.0
    %v1139 = vadd.f32 %v1137, %v1138
    %v1140 = vsel %vm1016, %v883, 0.0
    %v1141 = vadd.f32 %v1139, %v1140
    %v1142 = vsel %vm1016, %v885, 0.0
    %v1143 = vadd.f32 %v1141, %v1142
    %v1144 = vrot.slane %v1143, 4
    %v1145 = vadd.f32 %v1143, %v1144
    %v1146 = vrot.slane %v1145, 2
    %v1147 = vadd.f32 %v1145, %v1146
    %v1148 = vrot.slane %v1147, 1
    %v1149 = vadd.f32 %v1147, %v1148
    %vm1150 = vcmask 516096
    %1151 = vst.msk [vmem:[#allocation2] sm:$0x1] %vm1150, %v1149
    %v1152 = vmul.f32 %v728, %v728
    %v1153 = vmul.f32 %v730, %v730
    %v1154 = vmul.f32 %v733, %v733
    %v1155 = vmul.f32 %v735, %v735
    %v1156 = vmul.f32 %v738, %v738
    %v1157 = vmul.f32 %v740, %v740
    %v1158 = vmul.f32 %v743, %v743
    %v1159 = vmul.f32 %v745, %v745
    %v1160 = vmul.f32 %v748, %v748
    %v1161 = vmul.f32 %v750, %v750
    %v1162 = vmul.f32 %v753, %v753
    %v1163 = vmul.f32 %v755, %v755
    %v1164 = vmul.f32 %v758, %v758
    %v1165 = vmul.f32 %v760, %v760
    %v1166 = vmul.f32 %v763, %v763
    %v1167 = vmul.f32 %v765, %v765
    %v1168 = vmul.f32 %v768, %v768
    %v1169 = vmul.f32 %v770, %v770
    %v1170 = vmul.f32 %v773, %v773
    %v1171 = vmul.f32 %v775, %v775
    %v1172 = vmul.f32 %v778, %v778
    %v1173 = vmul.f32 %v780, %v780
    %v1174 = vmul.f32 %v783, %v783
    %v1175 = vmul.f32 %v785, %v785
    %v1176 = vmul.f32 %v788, %v788
    %v1177 = vmul.f32 %v790, %v790
    %v1178 = vmul.f32 %v793, %v793
    %v1179 = vmul.f32 %v795, %v795
    %v1180 = vmul.f32 %v798, %v798
    %v1181 = vmul.f32 %v800, %v800
    %v1182 = vmul.f32 %v803, %v803
    %v1183 = vmul.f32 %v805, %v805
    %v1184 = vmul.f32 %v808, %v808
    %v1185 = vmul.f32 %v810, %v810
    %v1186 = vmul.f32 %v813, %v813
    %v1187 = vmul.f32 %v815, %v815
    %v1188 = vmul.f32 %v818, %v818
    %v1189 = vmul.f32 %v820, %v820
    %v1190 = vmul.f32 %v823, %v823
    %v1191 = vmul.f32 %v825, %v825
    %v1192 = vmul.f32 %v828, %v828
    %v1193 = vmul.f32 %v830, %v830
    %v1194 = vmul.f32 %v833, %v833
    %v1195 = vmul.f32 %v835, %v835
    %v1196 = vmul.f32 %v838, %v838
    %v1197 = vmul.f32 %v840, %v840
    %v1198 = vmul.f32 %v843, %v843
    %v1199 = vmul.f32 %v845, %v845
    %v1200 = vmul.f32 %v848, %v848
    %v1201 = vmul.f32 %v850, %v850
    %v1202 = vmul.f32 %v853, %v853
    %v1203 = vmul.f32 %v855, %v855
    %v1204 = vmul.f32 %v858, %v858
    %v1205 = vmul.f32 %v860, %v860
    %v1206 = vmul.f32 %v863, %v863
    %v1207 = vmul.f32 %v865, %v865
    %v1208 = vmul.f32 %v868, %v868
    %v1209 = vmul.f32 %v870, %v870
    %v1210 = vmul.f32 %v873, %v873
    %v1211 = vmul.f32 %v875, %v875
    %v1212 = vmul.f32 %v878, %v878
    %v1213 = vmul.f32 %v880, %v880
    %v1214 = vmul.f32 %v883, %v883
    %v1215 = vmul.f32 %v885, %v885
    %v1216 = vsel %vm1016, %v1152, 0.0
    %v1217 = vsel %vm1016, %v1153, 0.0
    %v1218 = vadd.f32 %v1216, %v1217
    %v1219 = vsel %vm1016, %v1154, 0.0
    %v1220 = vadd.f32 %v1218, %v1219
    %v1221 = vsel %vm1016, %v1155, 0.0
    %v1222 = vadd.f32 %v1220, %v1221
    %v1223 = vsel %vm1016, %v1156, 0.0
    %v1224 = vadd.f32 %v1222, %v1223
    %v1225 = vsel %vm1016, %v1157, 0.0
    %v1226 = vadd.f32 %v1224, %v1225
    %v1227 = vsel %vm1016, %v1158, 0.0
    %v1228 = vadd.f32 %v1226, %v1227
    %v1229 = vsel %vm1016, %v1159, 0.0
    %v1230 = vadd.f32 %v1228, %v1229
    %v1231 = vsel %vm1016, %v1160, 0.0
    %v1232 = vadd.f32 %v1230, %v1231
    %v1233 = vsel %vm1016, %v1161, 0.0
    %v1234 = vadd.f32 %v1232, %v1233
    %v1235 = vsel %vm1016, %v1162, 0.0
    %v1236 = vadd.f32 %v1234, %v1235
    %v1237 = vsel %vm1016, %v1163, 0.0
    %v1238 = vadd.f32 %v1236, %v1237
    %v1239 = vsel %vm1016, %v1164, 0.0
    %v1240 = vadd.f32 %v1238, %v1239
    %v1241 = vsel %vm1016, %v1165, 0.0
    %v1242 = vadd.f32 %v1240, %v1241
    %v1243 = vsel %vm1016, %v1166, 0.0
    %v1244 = vadd.f32 %v1242, %v1243
    %v1245 = vsel %vm1016, %v1167, 0.0
    %v1246 = vadd.f32 %v1244, %v1245
    %v1247 = vsel %vm1016, %v1168, 0.0
    %v1248 = vadd.f32 %v1246, %v1247
    %v1249 = vsel %vm1016, %v1169, 0.0
    %v1250 = vadd.f32 %v1248, %v1249
    %v1251 = vsel %vm1016, %v1170, 0.0
    %v1252 = vadd.f32 %v1250, %v1251
    %v1253 = vsel %vm1016, %v1171, 0.0
    %v1254 = vadd.f32 %v1252, %v1253
    %v1255 = vsel %vm1016, %v1172, 0.0
    %v1256 = vadd.f32 %v1254, %v1255
    %v1257 = vsel %vm1016, %v1173, 0.0
    %v1258 = vadd.f32 %v1256, %v1257
    %v1259 = vsel %vm1016, %v1174, 0.0
    %v1260 = vadd.f32 %v1258, %v1259
    %v1261 = vsel %vm1016, %v1175, 0.0
    %v1262 = vadd.f32 %v1260, %v1261
    %v1263 = vsel %vm1016, %v1176, 0.0
    %v1264 = vadd.f32 %v1262, %v1263
    %v1265 = vsel %vm1016, %v1177, 0.0
    %v1266 = vadd.f32 %v1264, %v1265
    %v1267 = vsel %vm1016, %v1178, 0.0
    %v1268 = vadd.f32 %v1266, %v1267
    %v1269 = vsel %vm1016, %v1179, 0.0
    %v1270 = vadd.f32 %v1268, %v1269
    %v1271 = vsel %vm1016, %v1180, 0.0
    %v1272 = vadd.f32 %v1270, %v1271
    %v1273 = vsel %vm1016, %v1181, 0.0
    %v1274 = vadd.f32 %v1272, %v1273
    %v1275 = vsel %vm1016, %v1182, 0.0
    %v1276 = vadd.f32 %v1274, %v1275
    %v1277 = vsel %vm1016, %v1183, 0.0
    %v1278 = vadd.f32 %v1276, %v1277
    %v1279 = vsel %vm1016, %v1184, 0.0
    %v1280 = vadd.f32 %v1278, %v1279
    %v1281 = vsel %vm1016, %v1185, 0.0
    %v1282 = vadd.f32 %v1280, %v1281
    %v1283 = vsel %vm1016, %v1186, 0.0
    %v1284 = vadd.f32 %v1282, %v1283
    %v1285 = vsel %vm1016, %v1187, 0.0
    %v1286 = vadd.f32 %v1284, %v1285
    %v1287 = vsel %vm1016, %v1188, 0.0
    %v1288 = vadd.f32 %v1286, %v1287
    %v1289 = vsel %vm1016, %v1189, 0.0
    %v1290 = vadd.f32 %v1288, %v1289
    %v1291 = vsel %vm1016, %v1190, 0.0
    %v1292 = vadd.f32 %v1290, %v1291
    %v1293 = vsel %vm1016, %v1191, 0.0
    %v1294 = vadd.f32 %v1292, %v1293
    %v1295 = vsel %vm1016, %v1192, 0.0
    %v1296 = vadd.f32 %v1294, %v1295
    %v1297 = vsel %vm1016, %v1193, 0.0
    %v1298 = vadd.f32 %v1296, %v1297
    %v1299 = vsel %vm1016, %v1194, 0.0
    %v1300 = vadd.f32 %v1298, %v1299
    %v1301 = vsel %vm1016, %v1195, 0.0
    %v1302 = vadd.f32 %v1300, %v1301
    %v1303 = vsel %vm1016, %v1196, 0.0
    %v1304 = vadd.f32 %v1302, %v1303
    %v1305 = vsel %vm1016, %v1197, 0.0
    %v1306 = vadd.f32 %v1304, %v1305
    %v1307 = vsel %vm1016, %v1198, 0.0
    %v1308 = vadd.f32 %v1306, %v1307
    %v1309 = vsel %vm1016, %v1199, 0.0
    %v1310 = vadd.f32 %v1308, %v1309
    %v1311 = vsel %vm1016, %v1200, 0.0
    %v1312 = vadd.f32 %v1310, %v1311
    %v1313 = vsel %vm1016, %v1201, 0.0
    %v1314 = vadd.f32 %v1312, %v1313
    %v1315 = vsel %vm1016, %v1202, 0.0
    %v1316 = vadd.f32 %v1314, %v1315
    %v1317 = vsel %vm1016, %v1203, 0.0
    %v1318 = vadd.f32 %v1316, %v1317
    %v1319 = vsel %vm1016, %v1204, 0.0
    %v1320 = vadd.f32 %v1318, %v1319
    %v1321 = vsel %vm1016, %v1205, 0.0
    %v1322 = vadd.f32 %v1320, %v1321
    %v1323 = vsel %vm1016, %v1206, 0.0
    %v1324 = vadd.f32 %v1322, %v1323
    %v1325 = vsel %vm1016, %v1207, 0.0
    %v1326 = vadd.f32 %v1324, %v1325
    %v1327 = vsel %vm1016, %v1208, 0.0
    %v1328 = vadd.f32 %v1326, %v1327
    %v1329 = vsel %vm1016, %v1209, 0.0
    %v1330 = vadd.f32 %v1328, %v1329
    %v1331 = vsel %vm1016, %v1210, 0.0
    %v1332 = vadd.f32 %v1330, %v1331
    %v1333 = vsel %vm1016, %v1211, 0.0
    %v1334 = vadd.f32 %v1332, %v1333
    %v1335 = vsel %vm1016, %v1212, 0.0
    %v1336 = vadd.f32 %v1334, %v1335
    %v1337 = vsel %vm1016, %v1213, 0.0
    %v1338 = vadd.f32 %v1336, %v1337
    %v1339 = vsel %vm1016, %v1214, 0.0
    %v1340 = vadd.f32 %v1338, %v1339
    %v1341 = vsel %vm1016, %v1215, 0.0
    %v1342 = vadd.f32 %v1340, %v1341
    %v1343 = vrot.slane %v1342, 4
    %v1344 = vadd.f32 %v1342, %v1343
    %v1345 = vrot.slane %v1344, 2
    %v1346 = vadd.f32 %v1344, %v1345
    %v1347 = vrot.slane %v1346, 1
    %v1348 = vadd.f32 %v1346, %v1347
    %1349 = vst.msk [vmem:[#allocation4] sm:$0x1] %vm1150, %v1348
    // Predicated region
    $region10: #{tpu_custom_call.1} parent=1 // pred_check
      _
    $region11: #{tpu_custom_call.1} parent=1 // pred_check_branch
      %1351 = sbr.rel (0) target = $region13
    $region12: #{tpu_custom_call.1} parent=1 // pred_region
      _
    $region13: #{tpu_custom_call.1} parent=1 // pred_fallthru
      _
    // Predicated region
    $region14: #{tpu_custom_call.1} parent=1 // pred_check
      _
    $region15: #{tpu_custom_call.1} parent=1 // pred_check_branch
      %1353 = sbr.rel (0) target = $region17
    $region16: #{tpu_custom_call.1} parent=1 // pred_region
      %1355 = vsyncadd [#allocation3], 0
      %s1357 = sshll.u32 [#allocation2], 4
      %s1358 = int_to_ptr.vmem [resolvable:$true] %s1357
      %s1359 = sshll.u32 %s3, 4
      %s1360 = int_to_ptr.hbm [resolvable:$true] %s1359
      %1362 = dma.vmem_to_hbm [thread:$0]  %s1358, 16, %s1360, [#allocation3]
    $region17: #{tpu_custom_call.1} parent=1 // pred_fallthru
      _
    // Predicated region
    $region18: #{tpu_custom_call.1} parent=1 // pred_check
      _
    $region19: #{tpu_custom_call.1} parent=1 // pred_check_branch
      %1364 = sbr.rel (0) target = $region21
    $region20: #{tpu_custom_call.1} parent=1 // pred_region
      %1366 = vsyncadd [#allocation5], 0
      %s1368 = sshll.u32 [#allocation4], 4
      %s1369 = int_to_ptr.vmem [resolvable:$true] %s1368
      %s1370 = sshll.u32 %s4, 4
      %s1371 = int_to_ptr.hbm [resolvable:$true] %s1370
      %1373 = dma.vmem_to_hbm [thread:$0]  %s1369, 16, %s1371, [#allocation5]
    $region21: #{tpu_custom_call.1} parent=1 // pred_fallthru
      _
    // Predicated region
    $region22: #{tpu_custom_call.1} parent=1 // pred_check
      _
    $region23: #{tpu_custom_call.1} parent=1 // pred_check_branch
      %1375 = sbr.rel (0) target = $region25
    $region24: #{tpu_custom_call.1} parent=1 // pred_region
      _
    $region25: #{tpu_custom_call.1} parent=1 // pred_fallthru
      _
    // Predicated region
    $region26: #{tpu_custom_call.1} parent=1 // pred_check
      _
    $region27: #{tpu_custom_call.1} parent=1 // pred_check_branch
      %1377 = sbr.rel (0) target = $region29
    $region28: #{tpu_custom_call.1} parent=1 // pred_region
      %1379 = dma.done [#allocation3], 16
    $region29: #{tpu_custom_call.1} parent=1 // pred_fallthru
      _
    // Predicated region
    $region30: #{tpu_custom_call.1} parent=1 // pred_check
      _
    $region31: #{tpu_custom_call.1} parent=1 // pred_check_branch
      %1381 = sbr.rel (0) target = $region33
    $region32: #{tpu_custom_call.1} parent=1 // pred_region
      %1383 = dma.done [#allocation5], 16
    $region33: #{tpu_custom_call.1} parent=1 // pred_fallthru
      _
    %1384 = vsyncpa [#allocation3], 1
    %1385 = vsyncpa [#allocation5], 1

</llo_original>
